<compile_context>
chip_gen: v7x
topology: tpu7x:2x2x1
jax: 0.10.0
libtpu: 0.0.40
codegen_flags: <defaults>
</compile_context>

<pallas_src>
import functools
import numpy as np
import jax
import jax.numpy as jnp
from jax.experimental import pallas as pl
from jax.experimental.pallas import tpu as pltpu


FP = 128          # lane-padded feature width (multiple of 128 -> dense MXU/VPU tiles)
ALIGN = 16        # batch-tile alignment (bf16 sublane packing)
MAX_TB = 1024     # max batch tile: amortizes per-grid-step overhead, ~2 MiB VMEM/block


def _round_up(x, m):
    return ((x + m - 1) // m) * m


# ----------------------------------------------------------------------------
# Fused Pallas kernel: whole 3-node DAG, one batch tile per grid step.
#   x_ref    : (TB, F0)        f32  unpadded input tile
#   w_ref    : (3, 128, 128)   bf16 [W1p, W2p, W3p]; row 127 of each = bias
#   o_ref    : (TB, 128)       f32  node3 output (lanes >= 64 are zero)
#   xpad_ref : (TB, 128)       f32  scratch: lane-padded input + constant-1 bias lane
# ----------------------------------------------------------------------------
def _adjcell_fused_kernel(x_ref, w_ref, o_ref, xpad_ref, *, f0):
    tb, fp = xpad_ref.shape

    # Lane-pad the input INSIDE the kernel (no wrapper pad pass):
    #   lanes [0, f0)   <- x tile
    #   lanes [f0, 127) <- 0
    #   lane  127       <- 1.0   (bias lane: biases live in row 127 of each weight)
    lane = jax.lax.broadcasted_iota(jnp.int32, (tb, fp), 1)
    xpad_ref[...] = jnp.where(lane == fp - 1, 1.0, 0.0)
    xpad_ref[:, :f0] = x_ref[...]
    x0f = xpad_ref[...]                              # (TB, 128) f32, lane 127 == 1
    x0 = x0f.astype(jnp.bfloat16)

    # node1: relu(x0 @ W1 + b1)     (bias folded; padded lanes of h1 stay exactly 0)
    h1 = jnp.maximum(
        jnp.dot(x0, w_ref[0], preferred_element_type=jnp.float32), 0.0)

    # node2: 'add' combine folded:  relu((pad(x0) + h1) @ W2 + b2)
    z2 = (x0f + h1).astype(jnp.bfloat16)             # lane 127 stays 1 (h1[:,127]==0)
    h2 = jnp.maximum(
        jnp.dot(z2, w_ref[1], preferred_element_type=jnp.float32), 0.0)

    # node3: 'concat' combine folded into ONE matmul via an XLU lane roll:
    #   concat(x0, h2) @ W3  ==  (x0 + roll(h2, f0)) @ W3p
    # exact because h2 lanes >= 40 are exactly 0, so the circular wrap only
    # brings zeros into lanes < f0 (and lane 127 stays 1: h2[:,127-f0] == 0).
    z3 = (x0f + pltpu.roll(h2, shift=f0, axis=1)).astype(jnp.bfloat16)
    o = jnp.maximum(
        jnp.dot(z3, w_ref[2], preferred_element_type=jnp.float32), 0.0)
    o_ref[...] = o.astype(o_ref.dtype)


# ----------------------------------------------------------------------------
# Combiners (plain-JAX, only used by the reference check).
# ----------------------------------------------------------------------------
def _combine_add(parents):
    max_f = max(p.shape[-1] for p in parents)
    acc = jnp.zeros((parents[0].shape[0], max_f), dtype=parents[0].dtype)
    for p in parents:
        acc = acc + jnp.pad(p, ((0, 0), (0, max_f - p.shape[-1])))
    return acc


def _combine_concat(parents):
    return jnp.concatenate(parents, axis=-1)


# ----------------------------------------------------------------------------
# AdjCell: static DAG, all nodes fused into one pallas_call.
# ----------------------------------------------------------------------------
class AdjCellPallas:
    MATRIX = np.array(
        [[0, 1, 1, 1],
         [0, 0, 1, 0],
         [0, 0, 0, 1],
         [0, 0, 0, 0]], dtype=np.int32)
    NODES = [("input", None),
             ("add", 48),
             ("add", 40),
             ("concat", 64)]

    def __init__(self, input_features, key):
        # rolled-h2 lanes [F0, F0+40) plus the bias lane (127) must fit in 128
        assert input_features + self.NODES[2][1] < FP
        self.input_features = input_features

        # ---- per-node Linear params (f32 masters, used by the reference) ----
        self.params = []          # list of (W, b) per non-input node
        feat = [input_features]
        for j in range(1, len(self.NODES)):
            comb, out_f = self.NODES[j]
            parent_f = [feat[i] for i in range(j) if self.MATRIX[i, j] == 1]
            in_f = sum(parent_f) if comb == "concat" else max(parent_f)
            key, kw, kb = jax.random.split(key, 3)
            bound = 1.0 / np.sqrt(in_f)
            W = jax.random.uniform(kw, (in_f, out_f), jnp.float32, -bound, bound)
            b = jax.random.uniform(kb, (1, out_f), jnp.float32, -bound, bound)
            self.params.append((W, b))
            feat.append(out_f)
        self.output_shape = feat[-1]

        # ---- pack lane-padded bf16 weight slab; biases folded into row 127 --
        (W1, b1), (W2, b2), (W3, b3) = [
            (np.asarray(W), np.asarray(b)) for W, b in self.params]
        w_slab = np.zeros((3, FP, FP), np.float32)
        w_slab[0, :W1.shape[0], :W1.shape[1]] = W1
        w_slab[0, FP - 1, :b1.shape[1]] = b1[0]
        w_slab[1, :W2.shape[0], :W2.shape[1]] = W2
        w_slab[1, FP - 1, :b2.shape[1]] = b2[0]
        # concat fold via roll: rows [0:F0] multiply x0, rows [F0:F0+40] multiply
        # the rolled h2 -> same layout as the concat, so W3 packs contiguously.
        w_slab[2, :W3.shape[0], :W3.shape[1]] = W3
        w_slab[2, FP - 1, :b3.shape[1]] = b3[0]
        # All padding columns/rows are exactly zero (required for the fold proofs).
        self.w_slab = jnp.asarray(w_slab, dtype=jnp.bfloat16)

    def __call__(self, X):
        B, F0 = X.shape
        assert F0 == self.input_features

        # Batch tiling: sublane-aligned, >=2 tiles for medium/large batches so
        # both v7x TensorCores get work; tile capped at MAX_TB; padding waste
        # bounded by ~TB-1 rows (no round-up to a fixed 512-row tile anymore).
        B_al = _round_up(B, ALIGN)
        TB = max(ALIGN, min(MAX_TB, _round_up(pl.cdiv(B_al, 2), ALIGN)))
        n_tiles = pl.cdiv(B_al, TB)
        B_grid = n_tiles * TB
        Xp = X if B_grid == B else jnp.pad(X, ((0, B_grid - B), (0, 0)))

        kernel = functools.partial(_adjcell_fused_kernel, f0=F0)
        out = pl.pallas_call(
            kernel,
            out_shape=jax.ShapeDtypeStruct((B_grid, FP), X.dtype),
            grid=(n_tiles,),
            in_specs=[
                # unpadded input tile: last block dim == full array dim (legal)
                pl.BlockSpec((TB, F0), lambda i: (i, 0)),
                # resident bf16 weight slab (constant block index -> fetched once)
                pl.BlockSpec((3, FP, FP), lambda i: (0, 0, 0)),
            ],
            out_specs=pl.BlockSpec((TB, FP), lambda i: (i, 0)),
            scratch_shapes=[pltpu.VMEM((TB, FP), jnp.float32)],
            compiler_params=pltpu.CompilerParams(
                dimension_semantics=("parallel",)),
        )(Xp, self.w_slab)

        # TODO(synk): consumers that tolerate the lane-padded (B,128) slab can
        # skip this slice to avoid one extra read+write pass over the output.
        return out[:B, :self.output_shape]


# Pure-JAX f32 reference (original per-node combine + Linear + ReLU semantics).
def _reference_forward(cell, X):
    N = len(cell.NODES)
    outputs = [None] * N
    outputs[0] = X
    output = X
    for j in range(1, N):
        comb, _ = cell.NODES[j]
        parents = [outputs[i] for i in range(j) if cell.MATRIX[i, j] == 1]
        combined = _combine_concat(parents) if comb == "concat" else _combine_add(parents)
        W, b = cell.params[j - 1]
        output = jnp.maximum(combined @ W + b, 0.0)
        outputs[j] = output
    return output


if __name__ == "__main__":
    key = jax.random.PRNGKey(0)
    key, k_in, k_cell = jax.random.split(key, 3)

    B, F0 = 8, 32
    X = jax.random.normal(k_in, (B, F0), dtype=jnp.float32)

    cell = AdjCellPallas(input_features=F0, key=k_cell)

    out = jax.block_until_ready(cell(X))

    # Kernel runs the matmuls in bf16 (f32 accumulation); compare against the
    # f32 reference at bf16-level tolerance.
    ref = _reference_forward(cell, X)
    np.testing.assert_allclose(np.asarray(out), np.asarray(ref), rtol=5e-2, atol=5e-2)
    assert out.shape == (B, cell.output_shape)

    print("KERNEL_OK")
</pallas_src>

<mosaic_0001>
module attributes {stable_mosaic.version = 11 : i64} {
  func.func @_adjcell_fused_kernel(%arg0: i32, %arg1: memref<16x32xf32, #tpu.memory_space<vmem>>, %arg2: memref<3x128x128xbf16, #tpu.memory_space<vmem>>, %arg3: memref<16x128xf32, #tpu.memory_space<vmem>>, %arg4: memref<16x128xf32, #tpu.memory_space<vmem>>) attributes {dimension_semantics = [#tpu.dimension_semantics<parallel>], iteration_bounds = array<i64: 1>, scalar_prefetch = 0 : i64, scratch_operands = 1 : i64, tpu.core_type = #tpu.core_type<tc>, window_params = [{transform_indices = @transform_0, window_bounds = array<i64: 16, 32>}, {pipeline_mode = #tpu.pipeline_mode<synchronous>, transform_indices = @transform_1, window_bounds = array<i64: 3, 128, 128>}, {transform_indices = @transform_2, window_bounds = array<i64: 16, 128>}]} {
    %0 = tpu.iota {dimensions = array<i32: 1>} : vector<16x128xi32>
    %c127_i32 = arith.constant 127 : i32
    %1 = vector.broadcast %c127_i32 : i32 to vector<16x128xi32>
    %2 = arith.cmpi eq, %0, %1 : vector<16x128xi32>
    %cst = arith.constant 1.000000e+00 : f32
    %cst_0 = arith.constant 0.000000e+00 : f32
    %3 = vector.broadcast %cst : f32 to vector<16x128xf32>
    %4 = vector.broadcast %cst_0 : f32 to vector<16x128xf32>
    %5 = arith.select %2, %3, %4 : vector<16x128xi1>, vector<16x128xf32>
    %c0 = arith.constant 0 : index
    %c0_1 = arith.constant 0 : index
    %6 = vector.load %arg4[%c0, %c0_1] : memref<16x128xf32, #tpu.memory_space<vmem>>, vector<16x128xf32>
    tpu.vector_store %arg4[%c0, %c0_1], %5 {strides = array<i32>} : memref<16x128xf32, #tpu.memory_space<vmem>>, vector<16x128xf32>,
    %c0_2 = arith.constant 0 : index
    %c0_3 = arith.constant 0 : index
    %7 = vector.load %arg1[%c0_2, %c0_3] : memref<16x32xf32, #tpu.memory_space<vmem>>, vector<16x32xf32>
    %c0_4 = arith.constant 0 : index
    %c0_5 = arith.constant 0 : index
    %8 = vector.load %arg4[%c0_4, %c0_5] : memref<16x128xf32, #tpu.memory_space<vmem>>, vector<16x32xf32>
    tpu.vector_store %arg4[%c0_4, %c0_5], %7 {strides = array<i32>} : memref<16x128xf32, #tpu.memory_space<vmem>>, vector<16x32xf32>,
    %c0_6 = arith.constant 0 : index
    %c0_7 = arith.constant 0 : index
    %9 = vector.load %arg4[%c0_6, %c0_7] : memref<16x128xf32, #tpu.memory_space<vmem>>, vector<16x128xf32>
    %10 = arith.truncf %9 : vector<16x128xf32> to vector<16x128xbf16>
    %c0_8 = arith.constant 0 : index
    %c0_9 = arith.constant 0 : index
    %c0_10 = arith.constant 0 : index
    %11 = vector.load %arg2[%c0_8, %c0_9, %c0_10] : memref<3x128x128xbf16, #tpu.memory_space<vmem>>, vector<1x128x128xbf16>
    %12 = vector.shape_cast %11 : vector<1x128x128xbf16> to vector<128x128xbf16>
    %cst_11 = arith.constant dense<0.000000e+00> : vector<16x128xf32>
    %13 = tpu.matmul %10, %12, %cst_11 {dimension_numbers = #tpu.dot_dimension_numbers<[1], [0], [0], [1], [0, 0, 1, 1], [], []>} : vector<16x128xbf16>, vector<128x128xbf16>, vector<16x128xf32> -> vector<16x128xf32>
    %cst_12 = arith.constant 0.000000e+00 : f32
    %14 = vector.broadcast %cst_12 : f32 to vector<16x128xf32>
    %15 = arith.maximumf %13, %14 : vector<16x128xf32>
    %16 = arith.addf %9, %15 : vector<16x128xf32>
    %17 = arith.truncf %16 : vector<16x128xf32> to vector<16x128xbf16>
    %c1 = arith.constant 1 : index
    %c0_13 = arith.constant 0 : index
    %c0_14 = arith.constant 0 : index
    %18 = vector.load %arg2[%c1, %c0_13, %c0_14] : memref<3x128x128xbf16, #tpu.memory_space<vmem>>, vector<1x128x128xbf16>
    %19 = vector.shape_cast %18 : vector<1x128x128xbf16> to vector<128x128xbf16>
    %cst_15 = arith.constant dense<0.000000e+00> : vector<16x128xf32>
    %20 = tpu.matmul %17, %19, %cst_15 {dimension_numbers = #tpu.dot_dimension_numbers<[1], [0], [0], [1], [0, 0, 1, 1], [], []>} : vector<16x128xbf16>, vector<128x128xbf16>, vector<16x128xf32> -> vector<16x128xf32>
    %cst_16 = arith.constant 0.000000e+00 : f32
    %21 = vector.broadcast %cst_16 : f32 to vector<16x128xf32>
    %22 = arith.maximumf %20, %21 : vector<16x128xf32>
    %c32_i32 = arith.constant 32 : i32
    %23 = tpu.dynamic_rotate %22 by %c32_i32 dim 1 : vector<16x128xf32>, i32 -> vector<16x128xf32>
    %24 = arith.addf %9, %23 : vector<16x128xf32>
    %25 = arith.truncf %24 : vector<16x128xf32> to vector<16x128xbf16>
    %c2 = arith.constant 2 : index
    %c0_17 = arith.constant 0 : index
    %c0_18 = arith.constant 0 : index
    %26 = vector.load %arg2[%c2, %c0_17, %c0_18] : memref<3x128x128xbf16, #tpu.memory_space<vmem>>, vector<1x128x128xbf16>
    %27 = vector.shape_cast %26 : vector<1x128x128xbf16> to vector<128x128xbf16>
    %cst_19 = arith.constant dense<0.000000e+00> : vector<16x128xf32>
    %28 = tpu.matmul %25, %27, %cst_19 {dimension_numbers = #tpu.dot_dimension_numbers<[1], [0], [0], [1], [0, 0, 1, 1], [], []>} : vector<16x128xbf16>, vector<128x128xbf16>, vector<16x128xf32> -> vector<16x128xf32>
    %cst_20 = arith.constant 0.000000e+00 : f32
    %29 = vector.broadcast %cst_20 : f32 to vector<16x128xf32>
    %30 = arith.maximumf %28, %29 : vector<16x128xf32>
    %c0_21 = arith.constant 0 : index
    %c0_22 = arith.constant 0 : index
    %31 = vector.load %arg3[%c0_21, %c0_22] : memref<16x128xf32, #tpu.memory_space<vmem>>, vector<16x128xf32>
    tpu.vector_store %arg3[%c0_21, %c0_22], %30 {strides = array<i32>} : memref<16x128xf32, #tpu.memory_space<vmem>>, vector<16x128xf32>,
    return
  }
  func.func @transform_0(%arg0: i32) -> (i32, i32) {
    %c0_i32 = arith.constant 0 : i32
    %c0_i32_0 = arith.constant 0 : i32
    return %arg0, %c0_i32 : i32, i32
  }
  func.func @transform_1(%arg0: i32) -> (i32, i32, i32) {
    %c0_i32 = arith.constant 0 : i32
    %c0_i32_0 = arith.constant 0 : i32
    %c0_i32_1 = arith.constant 0 : i32
    %c0_i32_2 = arith.constant 0 : i32
    return %c0_i32, %c0_i32_0, %c0_i32_1 : i32, i32, i32
  }
  func.func @transform_2(%arg0: i32) -> (i32, i32) {
    %c0_i32 = arith.constant 0 : i32
    %c0_i32_0 = arith.constant 0 : i32
    return %arg0, %c0_i32 : i32, i32
  }
}

</mosaic_0001>

<llo_original>
// kernel: tpu_custom_call.1
$region0: #{tpu_custom_call.1}
  #allocation0 [shape = 'u32[]', space=smem, size = 0x4, offset = 0x4, fixed_abs, tag = 'smem constant byte address 0x4 - core index']
  #allocation1 [shape = 'u32[144,128]{1,0:T(1,128)}', space=vmem, size = 0x12000, scoped, tag = 'internal scratch']
  #allocation2 [shape = 'f32[16,128]{1,0:T(8,128)}', space=vmem, size = 0x2000, scoped, tag = 'scratch operand']
  %s0 = inlined_call_operand.hbm [shape: f32[16,32], index: 0, kind: input, shape index: {}]
  %s1 = inlined_call_operand.hbm [shape: bf16[3,128,128], index: 1, kind: input, shape index: {}]
  %s2 = inlined_call_operand.hbm [shape: f32[16,128], index: 2, kind: output, shape index: {}]
  %s3 = sld [smem:[#allocation0]]
  $region26: #{tpu_custom_call.1} parent=0
    _
  %s5 = ssub.s32 1, %s3
  %s6 = scalar_select 0, %s5, %s3
  $region1: #{tpu_custom_call.1} parent=0
    #allocation3 [shape = 'u8[8192]{0}', space=vmem, size = 0x2000, scoped, tag = 'input window, operand 0, single buffered']
    #allocation4 [shape = 's32[1]{0}', space=sflag, size = 0x4, scoped, tag = 'scoped memory for tpu_custom_call.1']
    #allocation5 [shape = 's32[1]{0}', space=sflag, size = 0x4, scoped, tag = 'scoped memory for tpu_custom_call.1']
    #allocation6 [shape = 'u8[98304]{0}', space=vmem, size = 0x18000, scoped, tag = 'input window, operand 1, single buffered']
    #allocation7 [shape = 's32[1]{0}', space=sflag, size = 0x4, scoped, tag = 'scoped memory for tpu_custom_call.1']
    #allocation8 [shape = 'u8[8192]{0}', space=vmem, size = 0x2000, scoped, tag = 'output window, operand 0, single buffered']
    %7 = vsyncpa [#allocation4], 0
    %8 = vsyncpa [#allocation7], 0
    %9 = vsyncpa [#allocation5], 0
    // Predicated region
    $region2: #{tpu_custom_call.1} parent=1 // pred_check
      _
    $region3: #{tpu_custom_call.1} parent=1 // pred_check_branch
      %11 = sbr.rel (0) target = $region5
    $region4: #{tpu_custom_call.1} parent=1 // pred_region
      %s13 = ssub.s32 256, 256
      %14 = vsyncadd [#allocation4], %s13
      %s15 = sshll.u32 [#allocation3], 4
      %s16 = int_to_ptr.vmem [resolvable:$true] %s15
      %21 = dma.hbm_to_vmem [thread:$0]  %s0, 256, %s16, [#allocation4], 128, 128, 8
    $region5: #{tpu_custom_call.1} parent=1 // pred_fallthru
      _
    // Predicated region
    $region6: #{tpu_custom_call.1} parent=1 // pred_check
      _
    $region7: #{tpu_custom_call.1} parent=1 // pred_check_branch
      %23 = sbr.rel (0) target = $region9
    $region8: #{tpu_custom_call.1} parent=1 // pred_region
      %s25 = ssub.s32 3072, 3072
      %26 = vsyncadd [#allocation7], %s25
      %s27 = sshll.u32 [#allocation6], 4
      %s28 = int_to_ptr.vmem [resolvable:$true] %s27
      %33 = dma.hbm_to_vmem [thread:$0]  %s1, 3072, %s28, [#allocation7], 64, 64, 4
    $region9: #{tpu_custom_call.1} parent=1 // pred_fallthru
      _
    // Predicated region
    $region10: #{tpu_custom_call.1} parent=1 // pred_check
      _
    $region11: #{tpu_custom_call.1} parent=1 // pred_check_branch
      %35 = sbr.rel (0) target = $region13
    $region12: #{tpu_custom_call.1} parent=1 // pred_region
      %36 = dma.done [#allocation4], 256
    $region13: #{tpu_custom_call.1} parent=1 // pred_fallthru
      _
    // Predicated region
    $region14: #{tpu_custom_call.1} parent=1 // pred_check
      _
    $region15: #{tpu_custom_call.1} parent=1 // pred_check_branch
      %38 = sbr.rel (0) target = $region17
    $region16: #{tpu_custom_call.1} parent=1 // pred_region
      %39 = dma.done [#allocation7], 3072
    $region17: #{tpu_custom_call.1} parent=1 // pred_fallthru
      _
    %v41 = vlaneseq
    %v42 = vand.u32 %v41, 127
    %vm43 = vcmp.eq.s32.totalorder %v42, 127
    %v44 = vsel %vm43, 1.0, 0.0
    %45 = vst [vmem:[#allocation2] sm:$0xff] %v44
    %46 = vst [vmem:[#allocation2 + $0x8] sm:$0xff] %v44
    %v47 = vld [vmem:[#allocation3] sm:$0xff]
    %v48 = vld [vmem:[#allocation3 + $0x8] sm:$0xff]
    %vm49 = vcmask 261120
    %50 = vst.msk [vmem:[#allocation2] sm:$0xff] %vm49, %v47
    %51 = vst.msk [vmem:[#allocation2 + $0x8] sm:$0xff] %vm49, %v48
    %v52 = vld [vmem:[#allocation2] sm:$0xff]
    %v53 = vld [vmem:[#allocation2 + $0x8] sm:$0xff]
    %v54 = vpack.c.bf16 %v53, %v52
    %v55 = vld [vmem:[#allocation6] sm:$0xf]
    %v56 = vld [vmem:[#allocation6 + $0x4] sm:$0xf]
    %v57 = vld [vmem:[#allocation6 + $0x8] sm:$0xf]
    %v58 = vld [vmem:[#allocation6 + $0xc] sm:$0xf]
    %v59 = vld [vmem:[#allocation6 + $0x10] sm:$0xf]
    %v60 = vld [vmem:[#allocation6 + $0x14] sm:$0xf]
    %v61 = vld [vmem:[#allocation6 + $0x18] sm:$0xf]
    %v62 = vld [vmem:[#allocation6 + $0x1c] sm:$0xf]
    %v63 = vld [vmem:[#allocation6 + $0x20] sm:$0xf]
    %v64 = vld [vmem:[#allocation6 + $0x24] sm:$0xf]
    %v65 = vld [vmem:[#allocation6 + $0x28] sm:$0xf]
    %v66 = vld [vmem:[#allocation6 + $0x2c] sm:$0xf]
    %v67 = vld [vmem:[#allocation6 + $0x30] sm:$0xf]
    %v68 = vld [vmem:[#allocation6 + $0x34] sm:$0xf]
    %v69 = vld [vmem:[#allocation6 + $0x38] sm:$0xf]
    %v70 = vld [vmem:[#allocation6 + $0x3c] sm:$0xf]
    %v87 = vunpack.c.l.b16 %v55
    %v88 = vunpack.c.l.b16 %v56
    %v89 = vunpack.c.l.b16 %v57
    %v90 = vunpack.c.l.b16 %v58
    %v91 = vunpack.c.l.b16 %v59
    %v92 = vunpack.c.l.b16 %v60
    %v93 = vunpack.c.l.b16 %v61
    %v94 = vunpack.c.l.b16 %v62
    %v95 = vunpack.c.l.b16 %v63
    %v96 = vunpack.c.l.b16 %v64
    %v97 = vunpack.c.l.b16 %v65
    %v98 = vunpack.c.l.b16 %v66
    %v99 = vunpack.c.l.b16 %v67
    %v100 = vunpack.c.l.b16 %v68
    %v101 = vunpack.c.l.b16 %v69
    %v102 = vunpack.c.l.b16 %v70
    %v103 = vpack.c.b16 %v88, %v87
    %v104 = vpack.c.b16 %v90, %v89
    %v105 = vpack.c.b16 %v92, %v91
    %v106 = vpack.c.b16 %v94, %v93
    %v107 = vpack.c.b16 %v96, %v95
    %v108 = vpack.c.b16 %v98, %v97
    %v109 = vpack.c.b16 %v100, %v99
    %v110 = vpack.c.b16 %v102, %v101
    %119 = vmatprep.subr.bf16.mxu0 0
    %120 = vmatpush1.bf16.msra.mxu0 %v103
    %121 = vmatprep.subr.bf16.mxu0 0
    %122 = vmatpush1.bf16.msra.mxu0 %v104
    %123 = vmatprep.subr.bf16.mxu0 0
    %124 = vmatpush1.bf16.msra.mxu0 %v105
    %125 = vmatprep.subr.bf16.mxu0 0
    %126 = vmatpush1.bf16.msra.mxu0 %v106
    %127 = vmatprep.subr.bf16.mxu0 0
    %128 = vmatpush1.bf16.msra.mxu0 %v107
    %129 = vmatprep.subr.bf16.mxu0 0
    %130 = vmatpush1.bf16.msra.mxu0 %v108
    %131 = vmatprep.subr.bf16.mxu0 0
    %132 = vmatpush1.bf16.msra.mxu0 %v109
    %133 = vmatprep.subr.bf16.mxu0 0
    %134 = vmatpush1.bf16.msra.mxu0 %v110
    %135 = vmatprep.subr.bf16.mxu0 0
    %136 = vmatpush1.bf16.msra.mxu0 0
    %137 = vmatprep.subr.bf16.mxu0 0
    %138 = vmatpush1.bf16.msra.mxu0 0
    %139 = vmatprep.subr.bf16.mxu0 0
    %140 = vmatpush1.bf16.msra.mxu0 0
    %141 = vmatprep.subr.bf16.mxu0 0
    %142 = vmatpush1.bf16.msra.mxu0 0
    %143 = vmatprep.subr.bf16.mxu0 0
    %144 = vmatpush1.bf16.msra.mxu0 0
    %145 = vmatprep.subr.bf16.mxu0 0
    %146 = vmatpush1.bf16.msra.mxu0 0
    %147 = vmatprep.subr.bf16.mxu0 0
    %148 = vmatpush1.bf16.msra.mxu0 0
    %149 = vmatprep.subr.bf16.mxu0 0
    %150 = vmatpush1.bf16.msra.mxu0 0
    %151 = vmatprep.mubr.bf16.mxu0 0
    %152 = vmatmul.mubr.bf16.gmra.mrb[0].mxu0 %v54
    %v153 = vpop.f32.mrb[0].mxu0
    %v154 = vadd.f32 0.0, %v153
    %v155 = vpop.f32.mrb[0].mxu0
    %v156 = vpop.f32.mrb[0].mxu0
    %v157 = vadd.f32 0.0, %v156
    %v158 = vpop.f32.mrb[0].mxu0
    %159 = vdwg.mxu0
    %v160 = vmax.f32 %v154, 0.0
    %v161 = vmax.f32 %v157, 0.0
    %v162 = vadd.f32 %v52, %v160
    %v163 = vadd.f32 %v53, %v161
    %v164 = vpack.c.bf16 %v163, %v162
    %s165 = scalar_lea.vmem [#allocation6], 64
    %v166 = vld [vmem:[%s165] sm:$0xf]
    %v167 = vld [vmem:[%s165 + $0x4] sm:$0xf]
    %v168 = vld [vmem:[%s165 + $0x8] sm:$0xf]
    %v169 = vld [vmem:[%s165 + $0xc] sm:$0xf]
    %v170 = vld [vmem:[%s165 + $0x10] sm:$0xf]
    %v171 = vld [vmem:[%s165 + $0x14] sm:$0xf]
    %v172 = vld [vmem:[%s165 + $0x18] sm:$0xf]
    %v173 = vld [vmem:[%s165 + $0x1c] sm:$0xf]
    %v174 = vld [vmem:[%s165 + $0x20] sm:$0xf]
    %v175 = vld [vmem:[%s165 + $0x24] sm:$0xf]
    %v176 = vld [vmem:[%s165 + $0x28] sm:$0xf]
    %v177 = vld [vmem:[%s165 + $0x2c] sm:$0xf]
    %v178 = vld [vmem:[%s165 + $0x30] sm:$0xf]
    %v179 = vld [vmem:[%s165 + $0x34] sm:$0xf]
    %v180 = vld [vmem:[%s165 + $0x38] sm:$0xf]
    %v181 = vld [vmem:[%s165 + $0x3c] sm:$0xf]
    %v198 = vunpack.c.l.b16 %v166
    %v199 = vunpack.c.l.b16 %v167
    %v200 = vunpack.c.l.b16 %v168
    %v201 = vunpack.c.l.b16 %v169
    %v202 = vunpack.c.l.b16 %v170
    %v203 = vunpack.c.l.b16 %v171
    %v204 = vunpack.c.l.b16 %v172
    %v205 = vunpack.c.l.b16 %v173
    %v206 = vunpack.c.l.b16 %v174
    %v207 = vunpack.c.l.b16 %v175
    %v208 = vunpack.c.l.b16 %v176
    %v209 = vunpack.c.l.b16 %v177
    %v210 = vunpack.c.l.b16 %v178
    %v211 = vunpack.c.l.b16 %v179
    %v212 = vunpack.c.l.b16 %v180
    %v213 = vunpack.c.l.b16 %v181
    %v214 = vpack.c.b16 %v199, %v198
    %v215 = vpack.c.b16 %v201, %v200
    %v216 = vpack.c.b16 %v203, %v202
    %v217 = vpack.c.b16 %v205, %v204
    %v218 = vpack.c.b16 %v207, %v206
    %v219 = vpack.c.b16 %v209, %v208
    %v220 = vpack.c.b16 %v211, %v210
    %v221 = vpack.c.b16 %v213, %v212
    %230 = vmatprep.subr.bf16.mxu0 0
    %231 = vmatpush1.bf16.msra.mxu0 %v214
    %232 = vmatprep.subr.bf16.mxu0 0
    %233 = vmatpush1.bf16.msra.mxu0 %v215
    %234 = vmatprep.subr.bf16.mxu0 0
    %235 = vmatpush1.bf16.msra.mxu0 %v216
    %236 = vmatprep.subr.bf16.mxu0 0
    %237 = vmatpush1.bf16.msra.mxu0 %v217
    %238 = vmatprep.subr.bf16.mxu0 0
    %239 = vmatpush1.bf16.msra.mxu0 %v218
    %240 = vmatprep.subr.bf16.mxu0 0
    %241 = vmatpush1.bf16.msra.mxu0 %v219
    %242 = vmatprep.subr.bf16.mxu0 0
    %243 = vmatpush1.bf16.msra.mxu0 %v220
    %244 = vmatprep.subr.bf16.mxu0 0
    %245 = vmatpush1.bf16.msra.mxu0 %v221
    %246 = vmatprep.subr.bf16.mxu0 0
    %247 = vmatpush1.bf16.msra.mxu0 0
    %248 = vmatprep.subr.bf16.mxu0 0
    %249 = vmatpush1.bf16.msra.mxu0 0
    %250 = vmatprep.subr.bf16.mxu0 0
    %251 = vmatpush1.bf16.msra.mxu0 0
    %252 = vmatprep.subr.bf16.mxu0 0
    %253 = vmatpush1.bf16.msra.mxu0 0
    %254 = vmatprep.subr.bf16.mxu0 0
    %255 = vmatpush1.bf16.msra.mxu0 0
    %256 = vmatprep.subr.bf16.mxu0 0
    %257 = vmatpush1.bf16.msra.mxu0 0
    %258 = vmatprep.subr.bf16.mxu0 0
    %259 = vmatpush1.bf16.msra.mxu0 0
    %260 = vmatprep.subr.bf16.mxu0 0
    %261 = vmatpush1.bf16.msra.mxu0 0
    %262 = vmatprep.mubr.bf16.mxu0 0
    %263 = vmatmul.mubr.bf16.gmra.mrb[0].mxu0 %v164
    %v264 = vpop.f32.mrb[0].mxu0
    %v265 = vadd.f32 0.0, %v264
    %v266 = vpop.f32.mrb[0].mxu0
    %v267 = vpop.f32.mrb[0].mxu0
    %v268 = vadd.f32 0.0, %v267
    %v269 = vpop.f32.mrb[0].mxu0
    %270 = vdwg.mxu0
    %v271 = vmax.f32 %v265, 0.0
    %v272 = vmax.f32 %v268, 0.0
    %273 = vrot.lane.b32.xlu0 %v271, 32
    %v274 = vpop.permute.xlu0 %273
    %275 = vrot.lane.b32.xlu0 %v272, 32
    %v276 = vpop.permute.xlu0 %275
    %v277 = vadd.f32 %v52, %v274
    %v278 = vadd.f32 %v53, %v276
    %v279 = vpack.c.bf16 %v278, %v277
    %s280 = scalar_lea.vmem [#allocation6], 128
    %v281 = vld [vmem:[%s280] sm:$0xf]
    %v282 = vld [vmem:[%s280 + $0x4] sm:$0xf]
    %v283 = vld [vmem:[%s280 + $0x8] sm:$0xf]
    %v284 = vld [vmem:[%s280 + $0xc] sm:$0xf]
    %v285 = vld [vmem:[%s280 + $0x10] sm:$0xf]
    %v286 = vld [vmem:[%s280 + $0x14] sm:$0xf]
    %v287 = vld [vmem:[%s280 + $0x18] sm:$0xf]
    %v288 = vld [vmem:[%s280 + $0x1c] sm:$0xf]
    %v289 = vld [vmem:[%s280 + $0x20] sm:$0xf]
    %v290 = vld [vmem:[%s280 + $0x24] sm:$0xf]
    %v291 = vld [vmem:[%s280 + $0x28] sm:$0xf]
    %v292 = vld [vmem:[%s280 + $0x2c] sm:$0xf]
    %v293 = vld [vmem:[%s280 + $0x30] sm:$0xf]
    %v294 = vld [vmem:[%s280 + $0x34] sm:$0xf]
    %v295 = vld [vmem:[%s280 + $0x38] sm:$0xf]
    %v296 = vld [vmem:[%s280 + $0x3c] sm:$0xf]
    %v313 = vunpack.c.l.b16 %v281
    %v314 = vunpack.c.l.b16 %v282
    %v315 = vunpack.c.l.b16 %v283
    %v316 = vunpack.c.l.b16 %v284
    %v317 = vunpack.c.l.b16 %v285
    %v318 = vunpack.c.l.b16 %v286
    %v319 = vunpack.c.l.b16 %v287
    %v320 = vunpack.c.l.b16 %v288
    %v321 = vunpack.c.l.b16 %v289
    %v322 = vunpack.c.l.b16 %v290
    %v323 = vunpack.c.l.b16 %v291
    %v324 = vunpack.c.l.b16 %v292
    %v325 = vunpack.c.l.b16 %v293
    %v326 = vunpack.c.l.b16 %v294
    %v327 = vunpack.c.l.b16 %v295
    %v328 = vunpack.c.l.b16 %v296
    %v329 = vpack.c.b16 %v314, %v313
    %v330 = vpack.c.b16 %v316, %v315
    %v331 = vpack.c.b16 %v318, %v317
    %v332 = vpack.c.b16 %v320, %v319
    %v333 = vpack.c.b16 %v322, %v321
    %v334 = vpack.c.b16 %v324, %v323
    %v335 = vpack.c.b16 %v326, %v325
    %v336 = vpack.c.b16 %v328, %v327
    %345 = vmatprep.subr.bf16.mxu0 0
    %346 = vmatpush1.bf16.msra.mxu0 %v329
    %347 = vmatprep.subr.bf16.mxu0 0
    %348 = vmatpush1.bf16.msra.mxu0 %v330
    %349 = vmatprep.subr.bf16.mxu0 0
    %350 = vmatpush1.bf16.msra.mxu0 %v331
    %351 = vmatprep.subr.bf16.mxu0 0
    %352 = vmatpush1.bf16.msra.mxu0 %v332
    %353 = vmatprep.subr.bf16.mxu0 0
    %354 = vmatpush1.bf16.msra.mxu0 %v333
    %355 = vmatprep.subr.bf16.mxu0 0
    %356 = vmatpush1.bf16.msra.mxu0 %v334
    %357 = vmatprep.subr.bf16.mxu0 0
    %358 = vmatpush1.bf16.msra.mxu0 %v335
    %359 = vmatprep.subr.bf16.mxu0 0
    %360 = vmatpush1.bf16.msra.mxu0 %v336
    %361 = vmatprep.subr.bf16.mxu0 0
    %362 = vmatpush1.bf16.msra.mxu0 0
    %363 = vmatprep.subr.bf16.mxu0 0
    %364 = vmatpush1.bf16.msra.mxu0 0
    %365 = vmatprep.subr.bf16.mxu0 0
    %366 = vmatpush1.bf16.msra.mxu0 0
    %367 = vmatprep.subr.bf16.mxu0 0
    %368 = vmatpush1.bf16.msra.mxu0 0
    %369 = vmatprep.subr.bf16.mxu0 0
    %370 = vmatpush1.bf16.msra.mxu0 0
    %371 = vmatprep.subr.bf16.mxu0 0
    %372 = vmatpush1.bf16.msra.mxu0 0
    %373 = vmatprep.subr.bf16.mxu0 0
    %374 = vmatpush1.bf16.msra.mxu0 0
    %375 = vmatprep.subr.bf16.mxu0 0
    %376 = vmatpush1.bf16.msra.mxu0 0
    %377 = vmatprep.mubr.bf16.mxu0 0
    %378 = vmatmul.mubr.bf16.gmra.mrb[0].mxu0 %v279
    %v379 = vpop.f32.mrb[0].mxu0
    %v380 = vadd.f32 0.0, %v379
    %v381 = vpop.f32.mrb[0].mxu0
    %v382 = vpop.f32.mrb[0].mxu0
    %v383 = vadd.f32 0.0, %v382
    %v384 = vpop.f32.mrb[0].mxu0
    %385 = vdwg.mxu0
    %v386 = vmax.f32 %v380, 0.0
    %v387 = vmax.f32 %v383, 0.0
    %388 = vst [vmem:[#allocation8] sm:$0xff] %v386
    %389 = vst [vmem:[#allocation8 + $0x8] sm:$0xff] %v387
    // Predicated region
    $region18: #{tpu_custom_call.1} parent=1 // pred_check
      _
    $region19: #{tpu_custom_call.1} parent=1 // pred_check_branch
      %391 = sbr.rel (0) target = $region21
    $region20: #{tpu_custom_call.1} parent=1 // pred_region
      %s393 = ssub.s32 256, 256
      %394 = vsyncadd [#allocation5], %s393
      %s395 = sshll.u32 [#allocation8], 4
      %s396 = int_to_ptr.vmem [resolvable:$true] %s395
      %401 = dma.vmem_to_hbm [thread:$0]  %s396, 256, %s2, [#allocation5], 128, 128, 8
    $region21: #{tpu_custom_call.1} parent=1 // pred_fallthru
      _
    // Predicated region
    $region22: #{tpu_custom_call.1} parent=1 // pred_check
      _
    $region23: #{tpu_custom_call.1} parent=1 // pred_check_branch
      %403 = sbr.rel (0) target = $region25
    $region24: #{tpu_custom_call.1} parent=1 // pred_region
      %404 = dma.done [#allocation5], 256
    $region25: #{tpu_custom_call.1} parent=1 // pred_fallthru
      _
    %405 = vsyncpa [#allocation4], 1
    %406 = vsyncpa [#allocation7], 1
    %407 = vsyncpa [#allocation5], 1

</llo_original>
